<compile_context>
chip_gen: v7x
topology: tpu7x:2x2x1
jax: 0.10.0
libtpu: 0.0.40
codegen_flags: <defaults>
</compile_context>

<pallas_src>
import jax
import jax.numpy as jnp
from jax.experimental import pallas as pl
from jax.experimental.pallas import tpu as pltpu


def _round_up(x, m):
    return ((x + m - 1) // m) * m


def _loannet_kernel(x_ref,
                    w1_ref, t1_ref,
                    w2_ref, t2_ref,
                    w3_ref, t3_ref,
                    w4_ref, b4_ref,
                    o_ref):
    """Fused 4-layer MLP forward for one batch tile. Weights are VMEM-resident."""
    # In-kernel downcast: x streams in as f32, cast once here (no wrapper pass).
    x = x_ref[...].astype(jnp.bfloat16)                              # (TB, in)

    # layer 1: linear (BN scale folded into weights) + shift + ReLU
    h = jnp.dot(x, w1_ref[...], preferred_element_type=jnp.float32)
    h = jnp.maximum(h + t1_ref[...], 0.0).astype(jnp.bfloat16)

    # layer 2
    h = jnp.dot(h, w2_ref[...], preferred_element_type=jnp.float32)
    h = jnp.maximum(h + t2_ref[...], 0.0).astype(jnp.bfloat16)

    # layer 3
    h = jnp.dot(h, w3_ref[...], preferred_element_type=jnp.float32)
    h = jnp.maximum(h + t3_ref[...], 0.0).astype(jnp.bfloat16)

    # layer 4: plain linear -> f32 logits (num_classes wide, no lane padding)
    out = jnp.dot(h, w4_ref[...], preferred_element_type=jnp.float32)
    o_ref[...] = out + b4_ref[...]
    # TODO(synk): Dropout omitted — identity in PyTorch eval mode.


def loannet_forward(x, params, num_classes, *, block_b=1024):
    """Fused LoanNet forward.

    x: (B, input_size) float32
    params: folded params from fold_params() (bf16 scale-folded weights,
            f32 shifts, unpadded final layer).
    Returns (B, num_classes) float32 logits.
    """
    B, in_f = x.shape

    # Batch tile: multiple of 8 sublanes, capped at block_b, and additionally
    # capped so the grid keeps >= ~4 steps (keeps both v7x TensorCores fed via
    # the "parallel" batch axis; harmless on single-TC v5e/v6e).
    tb = min(block_b, max(8, _round_up(pl.cdiv(B, 4), 8)))
    b_pad = _round_up(B, tb)
    if b_pad != B:
        x = jnp.pad(x, ((0, b_pad - B), (0, 0)))

    weight_args = (
        params["w1"], params["t1"],
        params["w2"], params["t2"],
        params["w3"], params["t3"],
        params["w4"], params["b4"],
    )

    def resident(a):
        # Full-extent block, constant block index -> stays in VMEM across steps.
        return pl.BlockSpec(a.shape, lambda i, n=a.ndim: (0,) * n)

    grid = (pl.cdiv(b_pad, tb),)

    out = pl.pallas_call(
        _loannet_kernel,
        out_shape=jax.ShapeDtypeStruct((b_pad, num_classes), jnp.float32),
        grid=grid,
        in_specs=[pl.BlockSpec((tb, in_f), lambda i: (i, 0))]
                 + [resident(a) for a in weight_args],
        out_specs=pl.BlockSpec((tb, num_classes), lambda i: (i, 0)),
        compiler_params=pltpu.CompilerParams(
            dimension_semantics=("parallel",)),
    )(x, *weight_args)

    return out[:B]


def make_params(key, input_size, hidden_size, num_classes):
    """Deterministic synthetic parameters mirroring LoanNet.__init__ shapes.

    Linear weights are PyTorch-style (out, in); BN: gamma, beta, mean, var.
    """
    l1 = int(hidden_size)
    l2 = int(hidden_size / 2)
    l3 = int(hidden_size / 4)
    sizes = [(l1, input_size), (l2, l1), (l3, l2), (num_classes, l3)]

    keys = jax.random.split(key, 16)
    params = {}
    ki = 0
    for idx, (out_f, in_f) in enumerate(sizes, start=1):
        bound = 1.0 / jnp.sqrt(jnp.float32(in_f))
        params[f"W{idx}"] = jax.random.uniform(
            keys[ki], (out_f, in_f), jnp.float32, -bound, bound); ki += 1
        params[f"b{idx}"] = jax.random.uniform(
            keys[ki], (out_f,), jnp.float32, -bound, bound); ki += 1
    for idx, out_f in enumerate([l1, l2, l3], start=1):
        params[f"gamma{idx}"] = 1.0 + 0.1 * jax.random.normal(keys[ki], (out_f,)); ki += 1
        params[f"beta{idx}"] = 0.1 * jax.random.normal(keys[ki], (out_f,)); ki += 1
        params[f"mean{idx}"] = 0.05 * jnp.arange(out_f, dtype=jnp.float32)
        params[f"var{idx}"] = 1.0 + 0.01 * jnp.arange(out_f, dtype=jnp.float32)
    return params


def fold_params(p, eps=1e-5):
    """Fold eval-mode BN + Linear bias into the weights and a per-feature shift.

    y = BN(x @ W.T + b) = x @ (W.T * s) + (b*s + beta - mean*s),
    s = gamma / sqrt(var + eps).
    Scale-folded weights are (in, out) bf16; shifts stay f32 (1, out).
    Final layer kept at its natural num_classes width (no lane padding).
    Returns (folded_params, num_classes).
    """
    folded = {}
    for idx in (1, 2, 3):
        s = p[f"gamma{idx}"] / jnp.sqrt(p[f"var{idx}"] + eps)
        t = p[f"b{idx}"] * s + p[f"beta{idx}"] - p[f"mean{idx}"] * s
        folded[f"w{idx}"] = (p[f"W{idx}"].T * s[None, :]).astype(jnp.bfloat16)
        folded[f"t{idx}"] = t[None, :].astype(jnp.float32)

    folded["w4"] = p["W4"].T.astype(jnp.bfloat16)        # (l3, num_classes)
    folded["b4"] = p["b4"][None, :].astype(jnp.float32)  # (1, num_classes)
    return folded, p["W4"].shape[0]


def loannet_reference(x, p, eps=1e-5):
    """Pure-JAX f32 reference (eval mode) for validation."""
    h = x
    for idx in (1, 2, 3):
        h = h @ p[f"W{idx}"].T + p[f"b{idx}"]
        h = (h - p[f"mean{idx}"]) / jnp.sqrt(p[f"var{idx}"] + eps)
        h = h * p[f"gamma{idx}"] + p[f"beta{idx}"]
        h = jnp.maximum(h, 0.0)
    return h @ p["W4"].T + p["b4"]


if __name__ == "__main__":
    input_size, hidden_size, num_classes = 16, 32, 4
    batch = 256                      # -> tb=64, 4 parallel grid steps

    key = jax.random.PRNGKey(0)
    k_x, k_p = jax.random.split(key)
    x = jax.random.normal(k_x, (batch, input_size), jnp.float32)

    raw = make_params(k_p, input_size, hidden_size, num_classes)
    params, nc = fold_params(raw)

    out = loannet_forward(x, params, nc)
    out = jax.block_until_ready(out)

    ref = loannet_reference(x, raw)
    assert out.shape == (batch, num_classes)
    # bf16 weights/activations with f32 accumulation: compare with a loose
    # relative tolerance against the f32 reference.
    rel_err = jnp.max(jnp.abs(out - ref)) / (jnp.max(jnp.abs(ref)) + 1e-6)
    assert rel_err < 5e-2, f"mismatch vs reference (max rel err {rel_err})"

    print("KERNEL_OK")
</pallas_src>

<mosaic_0001>
module attributes {stable_mosaic.version = 11 : i64} {
  func.func @_loannet_kernel(%arg0: i32, %arg1: memref<64x16xf32, #tpu.memory_space<vmem>>, %arg2: memref<16x32xbf16, #tpu.memory_space<vmem>>, %arg3: memref<1x32xf32, #tpu.memory_space<vmem>>, %arg4: memref<32x16xbf16, #tpu.memory_space<vmem>>, %arg5: memref<1x16xf32, #tpu.memory_space<vmem>>, %arg6: memref<16x8xbf16, #tpu.memory_space<vmem>>, %arg7: memref<1x8xf32, #tpu.memory_space<vmem>>, %arg8: memref<8x4xbf16, #tpu.memory_space<vmem>>, %arg9: memref<1x4xf32, #tpu.memory_space<vmem>>, %arg10: memref<64x4xf32, #tpu.memory_space<vmem>>) attributes {dimension_semantics = [#tpu.dimension_semantics<parallel>], iteration_bounds = array<i64: 4>, scalar_prefetch = 0 : i64, scratch_operands = 0 : i64, tpu.core_type = #tpu.core_type<tc>, window_params = [{transform_indices = @transform_0, window_bounds = array<i64: 64, 16>}, {pipeline_mode = #tpu.pipeline_mode<synchronous>, transform_indices = @transform_1, window_bounds = array<i64: 16, 32>}, {pipeline_mode = #tpu.pipeline_mode<synchronous>, transform_indices = @transform_2, window_bounds = array<i64: 1, 32>}, {pipeline_mode = #tpu.pipeline_mode<synchronous>, transform_indices = @transform_3, window_bounds = array<i64: 32, 16>}, {pipeline_mode = #tpu.pipeline_mode<synchronous>, transform_indices = @transform_4, window_bounds = array<i64: 1, 16>}, {pipeline_mode = #tpu.pipeline_mode<synchronous>, transform_indices = @transform_5, window_bounds = array<i64: 16, 8>}, {pipeline_mode = #tpu.pipeline_mode<synchronous>, transform_indices = @transform_6, window_bounds = array<i64: 1, 8>}, {pipeline_mode = #tpu.pipeline_mode<synchronous>, transform_indices = @transform_7, window_bounds = array<i64: 8, 4>}, {pipeline_mode = #tpu.pipeline_mode<synchronous>, transform_indices = @transform_8, window_bounds = array<i64: 1, 4>}, {transform_indices = @transform_9, window_bounds = array<i64: 64, 4>}]} {
    %c0 = arith.constant 0 : index
    %c0_0 = arith.constant 0 : index
    %0 = vector.load %arg1[%c0, %c0_0] : memref<64x16xf32, #tpu.memory_space<vmem>>, vector<64x16xf32>
    %1 = arith.truncf %0 : vector<64x16xf32> to vector<64x16xbf16>
    %c0_1 = arith.constant 0 : index
    %c0_2 = arith.constant 0 : index
    %2 = vector.load %arg2[%c0_1, %c0_2] : memref<16x32xbf16, #tpu.memory_space<vmem>>, vector<16x32xbf16>
    %cst = arith.constant dense<0.000000e+00> : vector<64x32xf32>
    %3 = tpu.matmul %1, %2, %cst {dimension_numbers = #tpu.dot_dimension_numbers<[1], [0], [0], [1], [0, 0, 1, 1], [], []>} : vector<64x16xbf16>, vector<16x32xbf16>, vector<64x32xf32> -> vector<64x32xf32>
    %c0_3 = arith.constant 0 : index
    %c0_4 = arith.constant 0 : index
    %4 = vector.load %arg3[%c0_3, %c0_4] : memref<1x32xf32, #tpu.memory_space<vmem>>, vector<1x32xf32>
    %5 = vector.broadcast %4 : vector<1x32xf32> to vector<64x32xf32>
    %6 = arith.addf %3, %5 : vector<64x32xf32>
    %cst_5 = arith.constant 0.000000e+00 : f32
    %7 = vector.broadcast %cst_5 : f32 to vector<64x32xf32>
    %8 = arith.maximumf %6, %7 : vector<64x32xf32>
    %9 = arith.truncf %8 : vector<64x32xf32> to vector<64x32xbf16>
    %c0_6 = arith.constant 0 : index
    %c0_7 = arith.constant 0 : index
    %10 = vector.load %arg4[%c0_6, %c0_7] : memref<32x16xbf16, #tpu.memory_space<vmem>>, vector<32x16xbf16>
    %cst_8 = arith.constant dense<0.000000e+00> : vector<64x16xf32>
    %11 = tpu.matmul %9, %10, %cst_8 {dimension_numbers = #tpu.dot_dimension_numbers<[1], [0], [0], [1], [0, 0, 1, 1], [], []>} : vector<64x32xbf16>, vector<32x16xbf16>, vector<64x16xf32> -> vector<64x16xf32>
    %c0_9 = arith.constant 0 : index
    %c0_10 = arith.constant 0 : index
    %12 = vector.load %arg5[%c0_9, %c0_10] : memref<1x16xf32, #tpu.memory_space<vmem>>, vector<1x16xf32>
    %13 = vector.broadcast %12 : vector<1x16xf32> to vector<64x16xf32>
    %14 = arith.addf %11, %13 : vector<64x16xf32>
    %cst_11 = arith.constant 0.000000e+00 : f32
    %15 = vector.broadcast %cst_11 : f32 to vector<64x16xf32>
    %16 = arith.maximumf %14, %15 : vector<64x16xf32>
    %17 = arith.truncf %16 : vector<64x16xf32> to vector<64x16xbf16>
    %c0_12 = arith.constant 0 : index
    %c0_13 = arith.constant 0 : index
    %18 = vector.load %arg6[%c0_12, %c0_13] : memref<16x8xbf16, #tpu.memory_space<vmem>>, vector<16x8xbf16>
    %cst_14 = arith.constant dense<0.000000e+00> : vector<64x8xf32>
    %19 = tpu.matmul %17, %18, %cst_14 {dimension_numbers = #tpu.dot_dimension_numbers<[1], [0], [0], [1], [0, 0, 1, 1], [], []>} : vector<64x16xbf16>, vector<16x8xbf16>, vector<64x8xf32> -> vector<64x8xf32>
    %c0_15 = arith.constant 0 : index
    %c0_16 = arith.constant 0 : index
    %20 = vector.load %arg7[%c0_15, %c0_16] : memref<1x8xf32, #tpu.memory_space<vmem>>, vector<1x8xf32>
    %21 = vector.broadcast %20 : vector<1x8xf32> to vector<64x8xf32>
    %22 = arith.addf %19, %21 : vector<64x8xf32>
    %cst_17 = arith.constant 0.000000e+00 : f32
    %23 = vector.broadcast %cst_17 : f32 to vector<64x8xf32>
    %24 = arith.maximumf %22, %23 : vector<64x8xf32>
    %25 = arith.truncf %24 : vector<64x8xf32> to vector<64x8xbf16>
    %c0_18 = arith.constant 0 : index
    %c0_19 = arith.constant 0 : index
    %26 = vector.load %arg8[%c0_18, %c0_19] : memref<8x4xbf16, #tpu.memory_space<vmem>>, vector<8x4xbf16>
    %cst_20 = arith.constant dense<0.000000e+00> : vector<64x4xf32>
    %27 = tpu.matmul %25, %26, %cst_20 {dimension_numbers = #tpu.dot_dimension_numbers<[1], [0], [0], [1], [0, 0, 1, 1], [], []>} : vector<64x8xbf16>, vector<8x4xbf16>, vector<64x4xf32> -> vector<64x4xf32>
    %c0_21 = arith.constant 0 : index
    %c0_22 = arith.constant 0 : index
    %28 = vector.load %arg9[%c0_21, %c0_22] : memref<1x4xf32, #tpu.memory_space<vmem>>, vector<1x4xf32>
    %29 = vector.broadcast %28 : vector<1x4xf32> to vector<64x4xf32>
    %30 = arith.addf %27, %29 : vector<64x4xf32>
    %c0_23 = arith.constant 0 : index
    %c0_24 = arith.constant 0 : index
    %31 = vector.load %arg10[%c0_23, %c0_24] : memref<64x4xf32, #tpu.memory_space<vmem>>, vector<64x4xf32>
    tpu.vector_store %arg10[%c0_23, %c0_24], %30 {strides = array<i32>} : memref<64x4xf32, #tpu.memory_space<vmem>>, vector<64x4xf32>,
    return
  }
  func.func @transform_0(%arg0: i32) -> (i32, i32) {
    %c0_i32 = arith.constant 0 : i32
    %c0_i32_0 = arith.constant 0 : i32
    return %arg0, %c0_i32 : i32, i32
  }
  func.func @transform_1(%arg0: i32) -> (i32, i32) {
    %c0_i32 = arith.constant 0 : i32
    %c0_i32_0 = arith.constant 0 : i32
    %c0_i32_1 = arith.constant 0 : i32
    return %c0_i32, %c0_i32_0 : i32, i32
  }
  func.func @transform_2(%arg0: i32) -> (i32, i32) {
    %c0_i32 = arith.constant 0 : i32
    %c0_i32_0 = arith.constant 0 : i32
    %c0_i32_1 = arith.constant 0 : i32
    return %c0_i32, %c0_i32_0 : i32, i32
  }
  func.func @transform_3(%arg0: i32) -> (i32, i32) {
    %c0_i32 = arith.constant 0 : i32
    %c0_i32_0 = arith.constant 0 : i32
    %c0_i32_1 = arith.constant 0 : i32
    return %c0_i32, %c0_i32_0 : i32, i32
  }
  func.func @transform_4(%arg0: i32) -> (i32, i32) {
    %c0_i32 = arith.constant 0 : i32
    %c0_i32_0 = arith.constant 0 : i32
    %c0_i32_1 = arith.constant 0 : i32
    return %c0_i32, %c0_i32_0 : i32, i32
  }
  func.func @transform_5(%arg0: i32) -> (i32, i32) {
    %c0_i32 = arith.constant 0 : i32
    %c0_i32_0 = arith.constant 0 : i32
    %c0_i32_1 = arith.constant 0 : i32
    return %c0_i32, %c0_i32_0 : i32, i32
  }
  func.func @transform_6(%arg0: i32) -> (i32, i32) {
    %c0_i32 = arith.constant 0 : i32
    %c0_i32_0 = arith.constant 0 : i32
    %c0_i32_1 = arith.constant 0 : i32
    return %c0_i32, %c0_i32_0 : i32, i32
  }
  func.func @transform_7(%arg0: i32) -> (i32, i32) {
    %c0_i32 = arith.constant 0 : i32
    %c0_i32_0 = arith.constant 0 : i32
    %c0_i32_1 = arith.constant 0 : i32
    return %c0_i32, %c0_i32_0 : i32, i32
  }
  func.func @transform_8(%arg0: i32) -> (i32, i32) {
    %c0_i32 = arith.constant 0 : i32
    %c0_i32_0 = arith.constant 0 : i32
    %c0_i32_1 = arith.constant 0 : i32
    return %c0_i32, %c0_i32_0 : i32, i32
  }
  func.func @transform_9(%arg0: i32) -> (i32, i32) {
    %c0_i32 = arith.constant 0 : i32
    %c0_i32_0 = arith.constant 0 : i32
    return %arg0, %c0_i32 : i32, i32
  }
}

</mosaic_0001>

<llo_original>
// kernel: tpu_custom_call.1
$region0: #{tpu_custom_call.1}
  #allocation0 [shape = 'u32[]', space=smem, size = 0x4, offset = 0x4, fixed_abs, tag = 'smem constant byte address 0x4 - core index']
  #allocation1 [shape = 'u32[144,128]{1,0:T(1,128)}', space=vmem, size = 0x12000, scoped, tag = 'internal scratch']
  %s0 = inlined_call_operand.vmem [shape: f32[256,16], index: 0, kind: input, shape index: {}]
  %s1 = inlined_call_operand.vmem [shape: bf16[16,32], index: 1, kind: input, shape index: {}]
  %s2 = inlined_call_operand.vmem [shape: f32[1,32], index: 2, kind: input, shape index: {}]
  %s3 = inlined_call_operand.vmem [shape: bf16[32,16], index: 3, kind: input, shape index: {}]
  %s4 = inlined_call_operand.vmem [shape: f32[1,16], index: 4, kind: input, shape index: {}]
  %s5 = inlined_call_operand.vmem [shape: bf16[16,8], index: 5, kind: input, shape index: {}]
  %s6 = inlined_call_operand.vmem [shape: f32[1,8], index: 6, kind: input, shape index: {}]
  %s7 = inlined_call_operand.vmem [shape: bf16[8,4], index: 7, kind: input, shape index: {}]
  %s8 = inlined_call_operand.vmem [shape: f32[1,4], index: 8, kind: input, shape index: {}]
  %s9 = inlined_call_operand.vmem [shape: f32[256,4], index: 9, kind: output, shape index: {}]
  %s10 = sld [smem:[#allocation0]]
  $region69: #{tpu_custom_call.1} parent=0
    _
  %s12 = ssub.s32 1, %s10
  %s13 = scalar_select 0, %s12, %s10
  loop: start=0, step=1, limit=6
  $region2: #{tpu_custom_call.1} parent=0 // loop_pre_header
    _
  $region3: #{tpu_custom_call.1} parent=0 // loop_header
    %s15 = sphi 0, %s19
    %p16 = scmp.ge.s32.totalorder %s15, 6
    %s25 = sphi 0, %s27
    %s28 = sphi 0, %s25
    %s29 = sphi 0, %s28
    %s45 = sphi 0, %s29
    %s49 = sphi 0, %s49
    %s51 = sphi 0, %s49
    %s52 = sphi 0, %s51
    %s66 = sphi 0, %s52
    %s70 = sphi 0, %s70
    %s72 = sphi 0, %s70
    %s73 = sphi 0, %s72
    %s87 = sphi 0, %s73
    %s91 = sphi 0, %s91
    %s93 = sphi 0, %s91
    %s94 = sphi 0, %s93
    %s108 = sphi 0, %s94
    %s112 = sphi 0, %s112
    %s114 = sphi 0, %s112
    %s115 = sphi 0, %s114
    %s129 = sphi 0, %s115
    %s133 = sphi 0, %s133
    %s135 = sphi 0, %s133
    %s136 = sphi 0, %s135
    %s150 = sphi 0, %s136
    %s154 = sphi 0, %s154
    %s156 = sphi 0, %s154
    %s157 = sphi 0, %s156
    %s171 = sphi 0, %s157
    %s175 = sphi 0, %s175
    %s177 = sphi 0, %s175
    %s178 = sphi 0, %s177
    %s192 = sphi 0, %s178
    %s196 = sphi 0, %s196
    %s198 = sphi 0, %s196
    %s199 = sphi 0, %s198
    %s213 = sphi 0, %s199
    %s219 = sphi 0, %s221
    %s222 = sphi 0, %s219
    %s223 = sphi 0, %s222
    %s239 = sphi 0, %s223
  $region4: #{tpu_custom_call.1} parent=0 // loop_header_branch
    %18 = sbr.rel (%p16) target = $region8
  $region5: #{tpu_custom_call.1} parent=0 // loop_body
    %s20 = ssub.s32 %s15, 1
    %s21 = ssub.s32 %s15, 2
    %s22 = sadd.s32 %s15, 1
    %s23 = ssub.s32 %s15, %s22
    %p24 = scmp.eq.s32.totalorder %s23, 0
    %s26 = sadd.s32 %s25, 1
    %s27 = scalar_select %p24, %s25, %s26
    %p30 = pneg %p24
    %p31 = scmp.eq.s32.totalorder %s15, 3
    %p32 = por %p30, %p31
    %p33 = scmp.ne.s32.totalorder %s25, %s28
    %p34 = scmp.eq.s32.totalorder %s15, 0
    %p35 = por %p33, %p34
    %p36 = scmp.ne.s32.totalorder %s25, %s28
    %p37 = scmp.eq.s32.totalorder %s20, 3
    %p38 = por %p36, %p37
    %p39 = scmp.ne.s32.totalorder %s28, %s29
    %p40 = scmp.eq.s32.totalorder %s20, 0
    %p41 = por %p39, %p40
    %p42 = scmp.ne.s32.totalorder %s28, %s29
    %p43 = scmp.eq.s32.totalorder %s21, 3
    %p44 = por %p42, %p43
    %p46 = scmp.ne.s32.totalorder %s29, %s45
    %p47 = scmp.eq.s32.totalorder %s21, 0
    %p48 = por %p46, %p47
    %s50 = sadd.s32 %s49, 1
    %p53 = scmp.eq.s32.totalorder %s15, 3
    %p54 = scmp.ne.s32.totalorder %s49, %s51
    %p55 = scmp.eq.s32.totalorder %s15, 0
    %p56 = por %p54, %p55
    %p57 = scmp.ne.s32.totalorder %s49, %s51
    %p58 = scmp.eq.s32.totalorder %s20, 3
    %p59 = por %p57, %p58
    %p60 = scmp.ne.s32.totalorder %s51, %s52
    %p61 = scmp.eq.s32.totalorder %s20, 0
    %p62 = por %p60, %p61
    %p63 = scmp.ne.s32.totalorder %s51, %s52
    %p64 = scmp.eq.s32.totalorder %s21, 3
    %p65 = por %p63, %p64
    %p67 = scmp.ne.s32.totalorder %s52, %s66
    %p68 = scmp.eq.s32.totalorder %s21, 0
    %p69 = por %p67, %p68
    %s71 = sadd.s32 %s70, 1
    %p74 = scmp.eq.s32.totalorder %s15, 3
    %p75 = scmp.ne.s32.totalorder %s70, %s72
    %p76 = scmp.eq.s32.totalorder %s15, 0
    %p77 = por %p75, %p76
    %p78 = scmp.ne.s32.totalorder %s70, %s72
    %p79 = scmp.eq.s32.totalorder %s20, 3
    %p80 = por %p78, %p79
    %p81 = scmp.ne.s32.totalorder %s72, %s73
    %p82 = scmp.eq.s32.totalorder %s20, 0
    %p83 = por %p81, %p82
    %p84 = scmp.ne.s32.totalorder %s72, %s73
    %p85 = scmp.eq.s32.totalorder %s21, 3
    %p86 = por %p84, %p85
    %p88 = scmp.ne.s32.totalorder %s73, %s87
    %p89 = scmp.eq.s32.totalorder %s21, 0
    %p90 = por %p88, %p89
    %s92 = sadd.s32 %s91, 1
    %p95 = scmp.eq.s32.totalorder %s15, 3
    %p96 = scmp.ne.s32.totalorder %s91, %s93
    %p97 = scmp.eq.s32.totalorder %s15, 0
    %p98 = por %p96, %p97
    %p99 = scmp.ne.s32.totalorder %s91, %s93
    %p100 = scmp.eq.s32.totalorder %s20, 3
    %p101 = por %p99, %p100
    %p102 = scmp.ne.s32.totalorder %s93, %s94
    %p103 = scmp.eq.s32.totalorder %s20, 0
    %p104 = por %p102, %p103
    %p105 = scmp.ne.s32.totalorder %s93, %s94
    %p106 = scmp.eq.s32.totalorder %s21, 3
    %p107 = por %p105, %p106
    %p109 = scmp.ne.s32.totalorder %s94, %s108
    %p110 = scmp.eq.s32.totalorder %s21, 0
    %p111 = por %p109, %p110
    %s113 = sadd.s32 %s112, 1
    %p116 = scmp.eq.s32.totalorder %s15, 3
    %p117 = scmp.ne.s32.totalorder %s112, %s114
    %p118 = scmp.eq.s32.totalorder %s15, 0
    %p119 = por %p117, %p118
    %p120 = scmp.ne.s32.totalorder %s112, %s114
    %p121 = scmp.eq.s32.totalorder %s20, 3
    %p122 = por %p120, %p121
    %p123 = scmp.ne.s32.totalorder %s114, %s115
    %p124 = scmp.eq.s32.totalorder %s20, 0
    %p125 = por %p123, %p124
    %p126 = scmp.ne.s32.totalorder %s114, %s115
    %p127 = scmp.eq.s32.totalorder %s21, 3
    %p128 = por %p126, %p127
    %p130 = scmp.ne.s32.totalorder %s115, %s129
    %p131 = scmp.eq.s32.totalorder %s21, 0
    %p132 = por %p130, %p131
    %s134 = sadd.s32 %s133, 1
    %p137 = scmp.eq.s32.totalorder %s15, 3
    %p138 = scmp.ne.s32.totalorder %s133, %s135
    %p139 = scmp.eq.s32.totalorder %s15, 0
    %p140 = por %p138, %p139
    %p141 = scmp.ne.s32.totalorder %s133, %s135
    %p142 = scmp.eq.s32.totalorder %s20, 3
    %p143 = por %p141, %p142
    %p144 = scmp.ne.s32.totalorder %s135, %s136
    %p145 = scmp.eq.s32.totalorder %s20, 0
    %p146 = por %p144, %p145
    %p147 = scmp.ne.s32.totalorder %s135, %s136
    %p148 = scmp.eq.s32.totalorder %s21, 3
    %p149 = por %p147, %p148
    %p151 = scmp.ne.s32.totalorder %s136, %s150
    %p152 = scmp.eq.s32.totalorder %s21, 0
    %p153 = por %p151, %p152
    %s155 = sadd.s32 %s154, 1
    %p158 = scmp.eq.s32.totalorder %s15, 3
    %p159 = scmp.ne.s32.totalorder %s154, %s156
    %p160 = scmp.eq.s32.totalorder %s15, 0
    %p161 = por %p159, %p160
    %p162 = scmp.ne.s32.totalorder %s154, %s156
    %p163 = scmp.eq.s32.totalorder %s20, 3
    %p164 = por %p162, %p163
    %p165 = scmp.ne.s32.totalorder %s156, %s157
    %p166 = scmp.eq.s32.totalorder %s20, 0
    %p167 = por %p165, %p166
    %p168 = scmp.ne.s32.totalorder %s156, %s157
    %p169 = scmp.eq.s32.totalorder %s21, 3
    %p170 = por %p168, %p169
    %p172 = scmp.ne.s32.totalorder %s157, %s171
    %p173 = scmp.eq.s32.totalorder %s21, 0
    %p174 = por %p172, %p173
    %s176 = sadd.s32 %s175, 1
    %p179 = scmp.eq.s32.totalorder %s15, 3
    %p180 = scmp.ne.s32.totalorder %s175, %s177
    %p181 = scmp.eq.s32.totalorder %s15, 0
    %p182 = por %p180, %p181
    %p183 = scmp.ne.s32.totalorder %s175, %s177
    %p184 = scmp.eq.s32.totalorder %s20, 3
    %p185 = por %p183, %p184
    %p186 = scmp.ne.s32.totalorder %s177, %s178
    %p187 = scmp.eq.s32.totalorder %s20, 0
    %p188 = por %p186, %p187
    %p189 = scmp.ne.s32.totalorder %s177, %s178
    %p190 = scmp.eq.s32.totalorder %s21, 3
    %p191 = por %p189, %p190
    %p193 = scmp.ne.s32.totalorder %s178, %s192
    %p194 = scmp.eq.s32.totalorder %s21, 0
    %p195 = por %p193, %p194
    %s197 = sadd.s32 %s196, 1
    %p200 = scmp.eq.s32.totalorder %s15, 3
    %p201 = scmp.ne.s32.totalorder %s196, %s198
    %p202 = scmp.eq.s32.totalorder %s15, 0
    %p203 = por %p201, %p202
    %p204 = scmp.ne.s32.totalorder %s196, %s198
    %p205 = scmp.eq.s32.totalorder %s20, 3
    %p206 = por %p204, %p205
    %p207 = scmp.ne.s32.totalorder %s198, %s199
    %p208 = scmp.eq.s32.totalorder %s20, 0
    %p209 = por %p207, %p208
    %p210 = scmp.ne.s32.totalorder %s198, %s199
    %p211 = scmp.eq.s32.totalorder %s21, 3
    %p212 = por %p210, %p211
    %p214 = scmp.ne.s32.totalorder %s199, %s213
    %p215 = scmp.eq.s32.totalorder %s21, 0
    %p216 = por %p214, %p215
    %s217 = ssub.s32 %s15, %s22
    %p218 = scmp.eq.s32.totalorder %s217, 0
    %s220 = sadd.s32 %s219, 1
    %s221 = scalar_select %p218, %s219, %s220
    %p224 = pneg %p218
    %p225 = scmp.eq.s32.totalorder %s15, 3
    %p226 = por %p224, %p225
    %p227 = scmp.ne.s32.totalorder %s219, %s222
    %p228 = scmp.eq.s32.totalorder %s15, 0
    %p229 = por %p227, %p228
    %p230 = scmp.ne.s32.totalorder %s219, %s222
    %p231 = scmp.eq.s32.totalorder %s20, 3
    %p232 = por %p230, %p231
    %p233 = scmp.ne.s32.totalorder %s222, %s223
    %p234 = scmp.eq.s32.totalorder %s20, 0
    %p235 = por %p233, %p234
    %p236 = scmp.ne.s32.totalorder %s222, %s223
    %p237 = scmp.eq.s32.totalorder %s21, 3
    %p238 = por %p236, %p237
    %p240 = scmp.ne.s32.totalorder %s223, %s239
    %p241 = scmp.eq.s32.totalorder %s21, 0
    %p242 = por %p240, %p241
    %p243 = scmp.le.s32.totalorder 1, %s15
    %p244 = scmp.lt.s32.totalorder %s15, 5
    %p245 = pnand %p243, %p244
    %p246 = pneg %p245
    // Predicated region
    $region9: #{tpu_custom_call.1} parent=5 // pred_check
      _
    $region10: #{tpu_custom_call.1} parent=5 // pred_check_branch
      %248 = sbr.rel (%p245) target = $region12
    $region11: #{tpu_custom_call.1} parent=5 // pred_region
      %s249 = ssub.s32 %s15, 1
      // Predicated region
      $region13: #{tpu_custom_call.1} parent=11 // pred_check
        %p250 = pneg %p62
      $region14: #{tpu_custom_call.1} parent=11 // pred_check_branch
        %252 = sbr.rel (%p250) target = $region16
      $region15: #{tpu_custom_call.1} parent=11 // pred_region
        _
      $region16: #{tpu_custom_call.1} parent=11 // pred_fallthru
        _
      // Predicated region
      $region17: #{tpu_custom_call.1} parent=11 // pred_check
        %p253 = pneg %p83
      $region18: #{tpu_custom_call.1} parent=11 // pred_check_branch
        %255 = sbr.rel (%p253) target = $region20
      $region19: #{tpu_custom_call.1} parent=11 // pred_region
        _
      $region20: #{tpu_custom_call.1} parent=11 // pred_fallthru
        _
      // Predicated region
      $region21: #{tpu_custom_call.1} parent=11 // pred_check
        %p256 = pneg %p104
      $region22: #{tpu_custom_call.1} parent=11 // pred_check_branch
        %258 = sbr.rel (%p256) target = $region24
      $region23: #{tpu_custom_call.1} parent=11 // pred_region
        _
      $region24: #{tpu_custom_call.1} parent=11 // pred_fallthru
        _
      // Predicated region
      $region25: #{tpu_custom_call.1} parent=11 // pred_check
        %p259 = pneg %p125
      $region26: #{tpu_custom_call.1} parent=11 // pred_check_branch
        %261 = sbr.rel (%p259) target = $region28
      $region27: #{tpu_custom_call.1} parent=11 // pred_region
        _
      $region28: #{tpu_custom_call.1} parent=11 // pred_fallthru
        _
      // Predicated region
      $region29: #{tpu_custom_call.1} parent=11 // pred_check
        %p262 = pneg %p146
      $region30: #{tpu_custom_call.1} parent=11 // pred_check_branch
        %264 = sbr.rel (%p262) target = $region32
      $region31: #{tpu_custom_call.1} parent=11 // pred_region
        _
      $region32: #{tpu_custom_call.1} parent=11 // pred_fallthru
        _
      // Predicated region
      $region33: #{tpu_custom_call.1} parent=11 // pred_check
        %p265 = pneg %p167
      $region34: #{tpu_custom_call.1} parent=11 // pred_check_branch
        %267 = sbr.rel (%p265) target = $region36
      $region35: #{tpu_custom_call.1} parent=11 // pred_region
        _
      $region36: #{tpu_custom_call.1} parent=11 // pred_fallthru
        _
      // Predicated region
      $region37: #{tpu_custom_call.1} parent=11 // pred_check
        %p268 = pneg %p188
      $region38: #{tpu_custom_call.1} parent=11 // pred_check_branch
        %270 = sbr.rel (%p268) target = $region40
      $region39: #{tpu_custom_call.1} parent=11 // pred_region
        _
      $region40: #{tpu_custom_call.1} parent=11 // pred_fallthru
        _
      // Predicated region
      $region41: #{tpu_custom_call.1} parent=11 // pred_check
        %p271 = pneg %p209
      $region42: #{tpu_custom_call.1} parent=11 // pred_check_branch
        %273 = sbr.rel (%p271) target = $region44
      $region43: #{tpu_custom_call.1} parent=11 // pred_region
        _
      $region44: #{tpu_custom_call.1} parent=11 // pred_fallthru
        _
    $region12: #{tpu_custom_call.1} parent=5 // pred_fallthru
      _
    %p274 = scmp.lt.s32.totalorder %s15, 4
    // Predicated region
    $region45: #{tpu_custom_call.1} parent=5 // pred_check
      %p275 = pneg %p274
    $region46: #{tpu_custom_call.1} parent=5 // pred_check_branch
      %277 = sbr.rel (%p275) target = $region48
    $region47: #{tpu_custom_call.1} parent=5 // pred_region
      // Predicated region
      $region49: #{tpu_custom_call.1} parent=47 // pred_check
        %p278 = pneg %p35
      $region50: #{tpu_custom_call.1} parent=47 // pred_check_branch
        %280 = sbr.rel (%p278) target = $region52
      $region51: #{tpu_custom_call.1} parent=47 // pred_region
        %s281 = smul.u32 8, %s15
        %p282 = scmp.lt.s32.totalorder %s281, 31
        %s283 = scalar_select %p282, %s281, 31
        %s284 = smul.addr %s283, 8
        %s285 = scalar_lea.vmem %s0, %s284
        %s286 = smul.u32 8, %s15
      $region52: #{tpu_custom_call.1} parent=47 // pred_fallthru
        _
    $region48: #{tpu_custom_call.1} parent=5 // pred_fallthru
      _
    %p287 = scmp.le.s32.totalorder 1, %s15
    %p288 = scmp.lt.s32.totalorder %s15, 5
    %p289 = pnand %p287, %p288
    %p290 = pneg %p289
    // Predicated region
    $region53: #{tpu_custom_call.1} parent=5 // pred_check
      _
    $region54: #{tpu_custom_call.1} parent=5 // pred_check_branch
      %292 = sbr.rel (%p289) target = $region56
    $region55: #{tpu_custom_call.1} parent=5 // pred_region
      %s293 = ssub.s32 %s15, 1
      %s294 = smul.u32 8, %s20
      %p295 = scmp.lt.s32.totalorder %s294, 31
      %s296 = scalar_select %p295, %s294, 31
      %s297 = smul.addr %s296, 8
      %s298 = scalar_lea.vmem %s0, %s297
      %p299 = pneg %p41
      %p300 = pneg %p38
      %p301 = pneg %p62
      %p302 = pneg %p59
      %p303 = pneg %p83
      %p304 = pneg %p80
      %p305 = pneg %p104
      %p306 = pneg %p101
      %p307 = pneg %p125
      %p308 = pneg %p122
      %p309 = pneg %p146
      %p310 = pneg %p143
      %p311 = pneg %p167
      %p312 = pneg %p164
      %p313 = pneg %p188
      %p314 = pneg %p185
      %p315 = pneg %p209
      %p316 = pneg %p206
      %p317 = pneg %p235
      %p318 = pneg %p232
      %s319 = smul.u32 8, %s20
      %p320 = scmp.lt.s32.totalorder %s319, 31
      %s321 = scalar_select %p320, %s319, 31
      %s322 = smul.addr %s321, 8
      %s323 = scalar_lea.vmem %s9, %s322
      %s324 = smul.u32 8, %s20
      %p325 = scmp.lt.s32.totalorder %s324, 31
      %s326 = scalar_select %p325, %s324, 31
      %s327 = smul.addr %s326, 8
      %s328 = scalar_lea.vmem %s0, %s327
      %s329 = smul.u32 8, %s20
      %s330 = smul.u32 8, %s20
      %p331 = scmp.lt.s32.totalorder %s330, 31
      %s332 = scalar_select %p331, %s330, 31
      %s333 = smul.addr %s332, 8
      %s334 = scalar_lea.vmem %s9, %s333
      %s335 = smul.u32 8, %s20
      %v337 = vld [vmem:[%s328] sm:$0xff]
      %v338 = vld [vmem:[%s328 + $0x8] sm:$0xff]
      %v339 = vld [vmem:[%s328 + $0x10] sm:$0xff]
      %v340 = vld [vmem:[%s328 + $0x18] sm:$0xff]
      %v341 = vld [vmem:[%s328 + $0x20] sm:$0xff]
      %v342 = vld [vmem:[%s328 + $0x28] sm:$0xff]
      %v343 = vld [vmem:[%s328 + $0x30] sm:$0xff]
      %v344 = vld [vmem:[%s328 + $0x38] sm:$0xff]
      %v345 = vpack.c.bf16 %v338, %v337
      %v346 = vpack.c.bf16 %v340, %v339
      %v347 = vpack.c.bf16 %v342, %v341
      %v348 = vpack.c.bf16 %v344, %v343
      %v349 = vld [vmem:[%s1] sm:$0xf]
      %v350 = vld [vmem:[%s1 + $0x4] sm:$0xf]
      %v351 = vld [vmem:[%s2] sm:$0x1]
      %v353 = vlaneseq
      %v354 = vshrl.u32 %v353, 7
      %v355 = vsub.s32 0, %v354
      %v356 = vrot.slane %v351, %v355
      %v360 = vunpack.c.l.b16 %v349
      %v361 = vunpack.c.l.b16 %v350
      %v362 = vpack.c.b16 %v361, %v360
      %vm364 = vcmask 130048
      %v366 = vsel %vm364, %v345, 0
      %v369 = vsel %vm364, %v346, 0
      %v372 = vsel %vm364, %v347, 0
      %v375 = vsel %vm364, %v348, 0
      %377 = vmatprep.subr.bf16.mxu0 0
      %378 = vmatpush1.bf16.msra.mxu0 %v362
      %379 = vmatprep.subr.bf16.mxu0 0
      %380 = vmatpush1.bf16.msra.mxu0 0
      %381 = vmatprep.subr.bf16.mxu0 0
      %382 = vmatpush1.bf16.msra.mxu0 0
      %383 = vmatprep.subr.bf16.mxu0 0
      %384 = vmatpush1.bf16.msra.mxu0 0
      %385 = vmatprep.subr.bf16.mxu0 0
      %386 = vmatpush1.bf16.msra.mxu0 0
      %387 = vmatprep.subr.bf16.mxu0 0
      %388 = vmatpush1.bf16.msra.mxu0 0
      %389 = vmatprep.subr.bf16.mxu0 0
      %390 = vmatpush1.bf16.msra.mxu0 0
      %391 = vmatprep.subr.bf16.mxu0 0
      %392 = vmatpush1.bf16.msra.mxu0 0
      %393 = vmatprep.subr.bf16.mxu0 0
      %394 = vmatpush1.bf16.msra.mxu0 0
      %395 = vmatprep.subr.bf16.mxu0 0
      %396 = vmatpush1.bf16.msra.mxu0 0
      %397 = vmatprep.subr.bf16.mxu0 0
      %398 = vmatpush1.bf16.msra.mxu0 0
      %399 = vmatprep.subr.bf16.mxu0 0
      %400 = vmatpush1.bf16.msra.mxu0 0
      %401 = vmatprep.subr.bf16.mxu0 0
      %402 = vmatpush1.bf16.msra.mxu0 0
      %403 = vmatprep.subr.bf16.mxu0 0
      %404 = vmatpush1.bf16.msra.mxu0 0
      %405 = vmatprep.subr.bf16.mxu0 0
      %406 = vmatpush1.bf16.msra.mxu0 0
      %407 = vmatprep.subr.bf16.mxu0 0
      %408 = vmatpush1.bf16.msra.mxu0 0
      %409 = vmatprep.mubr.bf16.mxu0 0
      %410 = vmatmul.mubr.bf16.gmra.mrb[0].mxu0 %v366
      %v411 = vpop.f32.mrb[0].mxu0
      %v412 = vadd.f32 %v356, %v411
      %v413 = vpop.f32.mrb[0].mxu0
      %v414 = vpop.f32.mrb[0].mxu0
      %v415 = vadd.f32 %v356, %v414
      %v416 = vpop.f32.mrb[0].mxu0
      %417 = vmatprep.mubr.bf16.mxu0 0
      %418 = vmatmul.mubr.bf16.gmra.mrb[0].mxu0 %v369
      %v419 = vpop.f32.mrb[0].mxu0
      %v420 = vadd.f32 %v356, %v419
      %v421 = vpop.f32.mrb[0].mxu0
      %v422 = vpop.f32.mrb[0].mxu0
      %v423 = vadd.f32 %v356, %v422
      %v424 = vpop.f32.mrb[0].mxu0
      %425 = vmatprep.mubr.bf16.mxu0 0
      %426 = vmatmul.mubr.bf16.gmra.mrb[0].mxu0 %v372
      %v427 = vpop.f32.mrb[0].mxu0
      %v428 = vadd.f32 %v356, %v427
      %v429 = vpop.f32.mrb[0].mxu0
      %v430 = vpop.f32.mrb[0].mxu0
      %v431 = vadd.f32 %v356, %v430
      %v432 = vpop.f32.mrb[0].mxu0
      %433 = vmatprep.mubr.bf16.mxu0 0
      %434 = vmatmul.mubr.bf16.gmra.mrb[0].mxu0 %v375
      %v435 = vpop.f32.mrb[0].mxu0
      %v436 = vadd.f32 %v356, %v435
      %v437 = vpop.f32.mrb[0].mxu0
      %v438 = vpop.f32.mrb[0].mxu0
      %v439 = vadd.f32 %v356, %v438
      %v440 = vpop.f32.mrb[0].mxu0
      %441 = vdwg.mxu0
      %v442 = vmax.f32 %v412, 0.0
      %v443 = vmax.f32 %v415, 0.0
      %v444 = vmax.f32 %v420, 0.0
      %v445 = vmax.f32 %v423, 0.0
      %v446 = vmax.f32 %v428, 0.0
      %v447 = vmax.f32 %v431, 0.0
      %v448 = vmax.f32 %v436, 0.0
      %v449 = vmax.f32 %v439, 0.0
      %v450 = vpack.c.bf16 %v443, %v442
      %v451 = vpack.c.bf16 %v445, %v444
      %v452 = vpack.c.bf16 %v447, %v446
      %v453 = vpack.c.bf16 %v449, %v448
      %v454 = vld [vmem:[%s3] sm:$0xf]
      %v455 = vld [vmem:[%s3 + $0x4] sm:$0xf]
      %v456 = vld [vmem:[%s3 + $0x8] sm:$0xf]
      %v457 = vld [vmem:[%s3 + $0xc] sm:$0xf]
      %v458 = vld [vmem:[%s4] sm:$0x1]
      %v460 = vlaneseq
      %v461 = vshrl.u32 %v460, 7
      %v462 = vsub.s32 0, %v461
      %v463 = vrot.slane %v458, %v462
      %v469 = vunpack.c.l.b16 %v454
      %v470 = vunpack.c.l.b16 %v455
      %v471 = vunpack.c.l.b16 %v456
      %v472 = vunpack.c.l.b16 %v457
      %v473 = vpack.c.b16 %v470, %v469
      %v474 = vpack.c.b16 %v472, %v471
      %vm477 = vcmask 261120
      %v479 = vsel %vm477, %v450, 0
      %v482 = vsel %vm477, %v451, 0
      %v485 = vsel %vm477, %v452, 0
      %v488 = vsel %vm477, %v453, 0
      %490 = vmatprep.subr.bf16.mxu0 0
      %491 = vmatpush1.bf16.msra.mxu0 %v473
      %492 = vmatprep.subr.bf16.mxu0 0
      %493 = vmatpush1.bf16.msra.mxu0 %v474
      %494 = vmatprep.subr.bf16.mxu0 0
      %495 = vmatpush1.bf16.msra.mxu0 0
      %496 = vmatprep.subr.bf16.mxu0 0
      %497 = vmatpush1.bf16.msra.mxu0 0
      %498 = vmatprep.subr.bf16.mxu0 0
      %499 = vmatpush1.bf16.msra.mxu0 0
      %500 = vmatprep.subr.bf16.mxu0 0
      %501 = vmatpush1.bf16.msra.mxu0 0
      %502 = vmatprep.subr.bf16.mxu0 0
      %503 = vmatpush1.bf16.msra.mxu0 0
      %504 = vmatprep.subr.bf16.mxu0 0
      %505 = vmatpush1.bf16.msra.mxu0 0
      %506 = vmatprep.subr.bf16.mxu0 0
      %507 = vmatpush1.bf16.msra.mxu0 0
      %508 = vmatprep.subr.bf16.mxu0 0
      %509 = vmatpush1.bf16.msra.mxu0 0
      %510 = vmatprep.subr.bf16.mxu0 0
      %511 = vmatpush1.bf16.msra.mxu0 0
      %512 = vmatprep.subr.bf16.mxu0 0
      %513 = vmatpush1.bf16.msra.mxu0 0
      %514 = vmatprep.subr.bf16.mxu0 0
      %515 = vmatpush1.bf16.msra.mxu0 0
      %516 = vmatprep.subr.bf16.mxu0 0
      %517 = vmatpush1.bf16.msra.mxu0 0
      %518 = vmatprep.subr.bf16.mxu0 0
      %519 = vmatpush1.bf16.msra.mxu0 0
      %520 = vmatprep.subr.bf16.mxu0 0
      %521 = vmatpush1.bf16.msra.mxu0 0
      %522 = vmatprep.mubr.bf16.mxu0 0
      %523 = vmatmul.mubr.bf16.gmra.mrb[0].mxu0 %v479
      %v524 = vpop.f32.mrb[0].mxu0
      %v525 = vadd.f32 %v463, %v524
      %v526 = vpop.f32.mrb[0].mxu0
      %v527 = vpop.f32.mrb[0].mxu0
      %v528 = vadd.f32 %v463, %v527
      %v529 = vpop.f32.mrb[0].mxu0
      %530 = vmatprep.mubr.bf16.mxu0 0
      %531 = vmatmul.mubr.bf16.gmra.mrb[0].mxu0 %v482
      %v532 = vpop.f32.mrb[0].mxu0
      %v533 = vadd.f32 %v463, %v532
      %v534 = vpop.f32.mrb[0].mxu0
      %v535 = vpop.f32.mrb[0].mxu0
      %v536 = vadd.f32 %v463, %v535
      %v537 = vpop.f32.mrb[0].mxu0
      %538 = vmatprep.mubr.bf16.mxu0 0
      %539 = vmatmul.mubr.bf16.gmra.mrb[0].mxu0 %v485
      %v540 = vpop.f32.mrb[0].mxu0
      %v541 = vadd.f32 %v463, %v540
      %v542 = vpop.f32.mrb[0].mxu0
      %v543 = vpop.f32.mrb[0].mxu0
      %v544 = vadd.f32 %v463, %v543
      %v545 = vpop.f32.mrb[0].mxu0
      %546 = vmatprep.mubr.bf16.mxu0 0
      %547 = vmatmul.mubr.bf16.gmra.mrb[0].mxu0 %v488
      %v548 = vpop.f32.mrb[0].mxu0
      %v549 = vadd.f32 %v463, %v548
      %v550 = vpop.f32.mrb[0].mxu0
      %v551 = vpop.f32.mrb[0].mxu0
      %v552 = vadd.f32 %v463, %v551
      %v553 = vpop.f32.mrb[0].mxu0
      %554 = vdwg.mxu0
      %v555 = vmax.f32 %v525, 0.0
      %v556 = vmax.f32 %v528, 0.0
      %v557 = vmax.f32 %v533, 0.0
      %v558 = vmax.f32 %v536, 0.0
      %v559 = vmax.f32 %v541, 0.0
      %v560 = vmax.f32 %v544, 0.0
      %v561 = vmax.f32 %v549, 0.0
      %v562 = vmax.f32 %v552, 0.0
      %v563 = vpack.c.bf16 %v556, %v555
      %v564 = vpack.c.bf16 %v558, %v557
      %v565 = vpack.c.bf16 %v560, %v559
      %v566 = vpack.c.bf16 %v562, %v561
      %v567 = vld [vmem:[%s5] sm:$0xf]
      %v568 = vld [vmem:[%s5 + $0x4] sm:$0xf]
      %v569 = vld [vmem:[%s6] sm:$0x1]
      %v571 = vlaneseq
      %v572 = vshrl.u32 %v571, 7
      %v573 = vsub.s32 0, %v572
      %v574 = vrot.slane %v569, %v573
      %v578 = vunpack.c.l.b16 %v567
      %v579 = vunpack.c.l.b16 %v568
      %v580 = vpack.c.b16 %v579, %v578
      %v583 = vsel %vm364, %v563, 0
      %v586 = vsel %vm364, %v564, 0
      %v589 = vsel %vm364, %v565, 0
      %v592 = vsel %vm364, %v566, 0
      %594 = vmatprep.subr.bf16.mxu0 0
      %595 = vmatpush1.bf16.msra.mxu0 %v580
      %596 = vmatprep.subr.bf16.mxu0 0
      %597 = vmatpush1.bf16.msra.mxu0 0
      %598 = vmatprep.subr.bf16.mxu0 0
      %599 = vmatpush1.bf16.msra.mxu0 0
      %600 = vmatprep.subr.bf16.mxu0 0
      %601 = vmatpush1.bf16.msra.mxu0 0
      %602 = vmatprep.subr.bf16.mxu0 0
      %603 = vmatpush1.bf16.msra.mxu0 0
      %604 = vmatprep.subr.bf16.mxu0 0
      %605 = vmatpush1.bf16.msra.mxu0 0
      %606 = vmatprep.subr.bf16.mxu0 0
      %607 = vmatpush1.bf16.msra.mxu0 0
      %608 = vmatprep.subr.bf16.mxu0 0
      %609 = vmatpush1.bf16.msra.mxu0 0
      %610 = vmatprep.subr.bf16.mxu0 0
      %611 = vmatpush1.bf16.msra.mxu0 0
      %612 = vmatprep.subr.bf16.mxu0 0
      %613 = vmatpush1.bf16.msra.mxu0 0
      %614 = vmatprep.subr.bf16.mxu0 0
      %615 = vmatpush1.bf16.msra.mxu0 0
      %616 = vmatprep.subr.bf16.mxu0 0
      %617 = vmatpush1.bf16.msra.mxu0 0
      %618 = vmatprep.subr.bf16.mxu0 0
      %619 = vmatpush1.bf16.msra.mxu0 0
      %620 = vmatprep.subr.bf16.mxu0 0
      %621 = vmatpush1.bf16.msra.mxu0 0
      %622 = vmatprep.subr.bf16.mxu0 0
      %623 = vmatpush1.bf16.msra.mxu0 0
      %624 = vmatprep.subr.bf16.mxu0 0
      %625 = vmatpush1.bf16.msra.mxu0 0
      %626 = vmatprep.mubr.bf16.mxu0 0
      %627 = vmatmul.mubr.bf16.gmra.mrb[0].mxu0 %v583
      %v628 = vpop.f32.mrb[0].mxu0
      %v629 = vadd.f32 %v574, %v628
      %v630 = vpop.f32.mrb[0].mxu0
      %v631 = vpop.f32.mrb[0].mxu0
      %v632 = vadd.f32 %v574, %v631
      %v633 = vpop.f32.mrb[0].mxu0
      %634 = vmatprep.mubr.bf16.mxu0 0
      %635 = vmatmul.mubr.bf16.gmra.mrb[0].mxu0 %v586
      %v636 = vpop.f32.mrb[0].mxu0
      %v637 = vadd.f32 %v574, %v636
      %v638 = vpop.f32.mrb[0].mxu0
      %v639 = vpop.f32.mrb[0].mxu0
      %v640 = vadd.f32 %v574, %v639
      %v641 = vpop.f32.mrb[0].mxu0
      %642 = vmatprep.mubr.bf16.mxu0 0
      %643 = vmatmul.mubr.bf16.gmra.mrb[0].mxu0 %v589
      %v644 = vpop.f32.mrb[0].mxu0
      %v645 = vadd.f32 %v574, %v644
      %v646 = vpop.f32.mrb[0].mxu0
      %v647 = vpop.f32.mrb[0].mxu0
      %v648 = vadd.f32 %v574, %v647
      %v649 = vpop.f32.mrb[0].mxu0
      %650 = vmatprep.mubr.bf16.mxu0 0
      %651 = vmatmul.mubr.bf16.gmra.mrb[0].mxu0 %v592
      %v652 = vpop.f32.mrb[0].mxu0
      %v653 = vadd.f32 %v574, %v652
      %v654 = vpop.f32.mrb[0].mxu0
      %v655 = vpop.f32.mrb[0].mxu0
      %v656 = vadd.f32 %v574, %v655
      %v657 = vpop.f32.mrb[0].mxu0
      %658 = vdwg.mxu0
      %v659 = vmax.f32 %v629, 0.0
      %v660 = vmax.f32 %v632, 0.0
      %v661 = vmax.f32 %v637, 0.0
      %v662 = vmax.f32 %v640, 0.0
      %v663 = vmax.f32 %v645, 0.0
      %v664 = vmax.f32 %v648, 0.0
      %v665 = vmax.f32 %v653, 0.0
      %v666 = vmax.f32 %v656, 0.0
      %v667 = vpack.c.bf16 %v660, %v659
      %v668 = vpack.c.bf16 %v662, %v661
      %v669 = vpack.c.bf16 %v664, %v663
      %v670 = vpack.c.bf16 %v666, %v665
      %v671 = vld [vmem:[%s7] sm:$0xf]
      %v672 = vld [vmem:[%s8] sm:$0x1]
      %v674 = vlaneseq
      %v675 = vshrl.u32 %v674, 7
      %v676 = vsub.s32 0, %v675
      %v677 = vrot.slane %v672, %v676
      %vm679 = vcmask 64512
      %v681 = vsel %vm679, %v667, 0
      %v684 = vsel %vm679, %v668, 0
      %v687 = vsel %vm679, %v669, 0
      %v690 = vsel %vm679, %v670, 0
      %vm692 = vcmask 1043456
      %v694 = vsel %vm692, %v671, 0
      %696 = vmatprep.subr.bf16.mxu0 0
      %697 = vmatpush1.bf16.msra.mxu0 %v694
      %698 = vmatprep.subr.bf16.mxu0 0
      %699 = vmatpush1.bf16.msra.mxu0 0
      %700 = vmatprep.subr.bf16.mxu0 0
      %701 = vmatpush1.bf16.msra.mxu0 0
      %702 = vmatprep.subr.bf16.mxu0 0
      %703 = vmatpush1.bf16.msra.mxu0 0
      %704 = vmatprep.subr.bf16.mxu0 0
      %705 = vmatpush1.bf16.msra.mxu0 0
      %706 = vmatprep.subr.bf16.mxu0 0
      %707 = vmatpush1.bf16.msra.mxu0 0
      %708 = vmatprep.subr.bf16.mxu0 0
      %709 = vmatpush1.bf16.msra.mxu0 0
      %710 = vmatprep.subr.bf16.mxu0 0
      %711 = vmatpush1.bf16.msra.mxu0 0
      %712 = vmatprep.subr.bf16.mxu0 0
      %713 = vmatpush1.bf16.msra.mxu0 0
      %714 = vmatprep.subr.bf16.mxu0 0
      %715 = vmatpush1.bf16.msra.mxu0 0
      %716 = vmatprep.subr.bf16.mxu0 0
      %717 = vmatpush1.bf16.msra.mxu0 0
      %718 = vmatprep.subr.bf16.mxu0 0
      %719 = vmatpush1.bf16.msra.mxu0 0
      %720 = vmatprep.subr.bf16.mxu0 0
      %721 = vmatpush1.bf16.msra.mxu0 0
      %722 = vmatprep.subr.bf16.mxu0 0
      %723 = vmatpush1.bf16.msra.mxu0 0
      %724 = vmatprep.subr.bf16.mxu0 0
      %725 = vmatpush1.bf16.msra.mxu0 0
      %726 = vmatprep.subr.bf16.mxu0 0
      %727 = vmatpush1.bf16.msra.mxu0 0
      %728 = vmatprep.mubr.bf16.mxu0 0
      %729 = vmatmul.mubr.bf16.gmra.mrb[0].mxu0 %v681
      %v730 = vpop.f32.mrb[0].mxu0
      %v731 = vadd.f32 %v677, %v730
      %v732 = vpop.f32.mrb[0].mxu0
      %v733 = vpop.f32.mrb[0].mxu0
      %v734 = vadd.f32 %v677, %v733
      %v735 = vpop.f32.mrb[0].mxu0
      %736 = vmatprep.mubr.bf16.mxu0 0
      %737 = vmatmul.mubr.bf16.gmra.mrb[0].mxu0 %v684
      %v738 = vpop.f32.mrb[0].mxu0
      %v739 = vadd.f32 %v677, %v738
      %v740 = vpop.f32.mrb[0].mxu0
      %v741 = vpop.f32.mrb[0].mxu0
      %v742 = vadd.f32 %v677, %v741
      %v743 = vpop.f32.mrb[0].mxu0
      %744 = vmatprep.mubr.bf16.mxu0 0
      %745 = vmatmul.mubr.bf16.gmra.mrb[0].mxu0 %v687
      %v746 = vpop.f32.mrb[0].mxu0
      %v747 = vadd.f32 %v677, %v746
      %v748 = vpop.f32.mrb[0].mxu0
      %v749 = vpop.f32.mrb[0].mxu0
      %v750 = vadd.f32 %v677, %v749
      %v751 = vpop.f32.mrb[0].mxu0
      %752 = vmatprep.mubr.bf16.mxu0 0
      %753 = vmatmul.mubr.bf16.gmra.mrb[0].mxu0 %v690
      %v754 = vpop.f32.mrb[0].mxu0
      %v755 = vadd.f32 %v677, %v754
      %v756 = vpop.f32.mrb[0].mxu0
      %v757 = vpop.f32.mrb[0].mxu0
      %v758 = vadd.f32 %v677, %v757
      %v759 = vpop.f32.mrb[0].mxu0
      %760 = vdwg.mxu0
      %vm761 = vcmask 31744
      %762 = vst.msk [vmem:[%s334] sm:$0xff] %vm761, %v731
      %763 = vst.msk [vmem:[%s334 + $0x8] sm:$0xff] %vm761, %v734
      %764 = vst.msk [vmem:[%s334 + $0x10] sm:$0xff] %vm761, %v739
      %765 = vst.msk [vmem:[%s334 + $0x18] sm:$0xff] %vm761, %v742
      %766 = vst.msk [vmem:[%s334 + $0x20] sm:$0xff] %vm761, %v747
      %767 = vst.msk [vmem:[%s334 + $0x28] sm:$0xff] %vm761, %v750
      %768 = vst.msk [vmem:[%s334 + $0x30] sm:$0xff] %vm761, %v755
      %769 = vst.msk [vmem:[%s334 + $0x38] sm:$0xff] %vm761, %v758
      %s770 = smul.u32 8, %s20
      %p771 = scmp.lt.s32.totalorder %s770, 31
      %s772 = scalar_select %p771, %s770, 31
      %s773 = smul.addr %s772, 8
      %s774 = scalar_lea.vmem %s9, %s773
      // Predicated region
      $region57: #{tpu_custom_call.1} parent=55 // pred_check
        %p775 = pneg %p232
      $region58: #{tpu_custom_call.1} parent=55 // pred_check_branch
        %777 = sbr.rel (%p775) target = $region60
      $region59: #{tpu_custom_call.1} parent=55 // pred_region
        %s778 = smul.u32 8, %s20
      $region60: #{tpu_custom_call.1} parent=55 // pred_fallthru
        _
    $region56: #{tpu_custom_call.1} parent=5 // pred_fallthru
      _
    %p779 = scmp.le.s32.totalorder 2, %s15
    // Predicated region
    $region61: #{tpu_custom_call.1} parent=5 // pred_check
      %p780 = pneg %p779
    $region62: #{tpu_custom_call.1} parent=5 // pred_check_branch
      %782 = sbr.rel (%p780) target = $region64
    $region63: #{tpu_custom_call.1} parent=5 // pred_region
      %s783 = ssub.s32 %s15, 2
      // Predicated region
      $region65: #{tpu_custom_call.1} parent=63 // pred_check
        %p784 = pneg %p238
      $region66: #{tpu_custom_call.1} parent=63 // pred_check_branch
        %786 = sbr.rel (%p784) target = $region68
      $region67: #{tpu_custom_call.1} parent=63 // pred_region
        %s787 = smul.u32 8, %s21
        %p788 = scmp.lt.s32.totalorder %s787, 31
        %s789 = scalar_select %p788, %s787, 31
        %s790 = smul.addr %s789, 8
        %s791 = scalar_lea.vmem %s9, %s790
      $region68: #{tpu_custom_call.1} parent=63 // pred_fallthru
        _
    $region64: #{tpu_custom_call.1} parent=5 // pred_fallthru
      _
  $region6: #{tpu_custom_call.1} parent=0 // loop_footer
    %s19 = sadd.s32 1, %s15
  $region7: #{tpu_custom_call.1} parent=0 // loop_footer_branch
    %14 = sbr.rel target = $region3
  $region8: #{tpu_custom_call.1} parent=0 // loop_exit
    _

</llo_original>
